<compile_context>
chip_gen: v6e
topology: v6e:2x2x1
jax: 0.10.0
libtpu: 0.0.40
codegen_flags: <defaults>
</compile_context>

<pallas_src>
import numpy as np
import jax
import jax.numpy as jnp
from jax.experimental import pallas as pl
from jax.experimental.pallas import tpu as pltpu


def _copy_kernel(x_ref, o_ref):
    o_ref[...] = x_ref[...]


def _lane_tile(d, max_elems):
    """Largest multiple of 128 that divides `d` and is <= max_elems; else full `d`."""
    if d <= max_elems:
        return d
    cap = max_elems - (max_elems % 128)
    for t in range(cap, 127, -128):
        if d % t == 0:
            return t
    return d  # no suitable 128-multiple divisor -> take the full dim (always legal)


def _sublane_tile(b, max_rows):
    """Largest multiple of 8 that divides `b` and is <= max_rows; else full `b`."""
    if b <= max_rows:
        return b
    cap = max_rows - (max_rows % 8)
    for t in range(cap, 7, -8):
        if b % t == 0:
            return t
    return b


@jax.jit
def pallas_flatten(x):
    """Flatten.forward: x.view(B, -1), materialized by a tiled Pallas copy kernel."""
    B = x.shape[0]
    D = int(np.prod(x.shape[1:])) if x.ndim > 1 else 1

    # Row-major collapse of trailing dims == torch .view(B, -1). Free metadata op
    # under jit; the Pallas kernel below is the only data movement.
    x2 = jnp.reshape(x, (B, D))

    itemsize = jnp.dtype(x.dtype).itemsize
    # Keep one (bb, bd) block <= ~2 MiB so double-buffered input + output buffers
    # stay well inside the default scoped-VMEM window on every chip generation.
    max_block_elems = max(128, (2 * 1024 * 1024) // itemsize)
    bd = _lane_tile(D, max_block_elems)
    bb = _sublane_tile(B, max(1, max_block_elems // max(bd, 1)))

    grid = (B // bb, D // bd)

    return pl.pallas_call(
        _copy_kernel,
        out_shape=jax.ShapeDtypeStruct((B, D), x.dtype),
        grid_spec=pltpu.PrefetchScalarGridSpec(
            num_scalar_prefetch=0,
            grid=grid,
            in_specs=[pl.BlockSpec((bb, bd), lambda i, j: (i, j))],
            out_specs=pl.BlockSpec((bb, bd), lambda i, j: (i, j)),
        ),
        compiler_params=pltpu.CompilerParams(
            dimension_semantics=("parallel", "parallel")),
        cost_estimate=pl.CostEstimate(
            flops=0, transcendentals=0, bytes_accessed=2 * B * D * itemsize),
    )(x2)


if __name__ == "__main__":
    key = jax.random.PRNGKey(0)
    # Small shape consistent with the module's use as a shape-adaptation layer:
    # a [B, C, H, W] feature map, flattened to [B, C*H*W].
    x = jax.random.normal(key, (2, 4, 16, 16), jnp.float32)

    y = pallas_flatten(x)
    jax.block_until_ready(y)

    ref = jnp.reshape(x, (x.shape[0], -1))
    assert y.shape == (2, 4 * 16 * 16), y.shape
    assert y.dtype == x.dtype
    np.testing.assert_array_equal(np.asarray(y), np.asarray(ref))
    print("KERNEL_OK")
</pallas_src>

<mosaic_0001>
module attributes {stable_mosaic.version = 11 : i64} {
  func.func @_copy_kernel(%arg0: i32, %arg1: i32, %arg2: memref<2x1024xf32, #tpu.memory_space<vmem>>, %arg3: memref<2x1024xf32, #tpu.memory_space<vmem>>) attributes {dimension_semantics = [#tpu.dimension_semantics<parallel>, #tpu.dimension_semantics<parallel>], iteration_bounds = array<i64: 1, 1>, scalar_prefetch = 0 : i64, scratch_operands = 0 : i64, tpu.core_type = #tpu.core_type<tc>, window_params = [{transform_indices = @transform_0, window_bounds = array<i64: 2, 1024>}, {transform_indices = @transform_1, window_bounds = array<i64: 2, 1024>}]} {
    %c0 = arith.constant 0 : index
    %c0_0 = arith.constant 0 : index
    %0 = vector.load %arg2[%c0, %c0_0] : memref<2x1024xf32, #tpu.memory_space<vmem>>, vector<2x1024xf32>
    %c0_1 = arith.constant 0 : index
    %c0_2 = arith.constant 0 : index
    %1 = vector.load %arg3[%c0_1, %c0_2] : memref<2x1024xf32, #tpu.memory_space<vmem>>, vector<2x1024xf32>
    tpu.vector_store %arg3[%c0_1, %c0_2], %0 {strides = array<i32>} : memref<2x1024xf32, #tpu.memory_space<vmem>>, vector<2x1024xf32>,
    return
  }
  func.func @transform_0(%arg0: i32, %arg1: i32) -> (i32, i32) {
    %c0_i32 = arith.constant 0 : i32
    return %arg0, %arg1 : i32, i32
  }
  func.func @transform_1(%arg0: i32, %arg1: i32) -> (i32, i32) {
    %c0_i32 = arith.constant 0 : i32
    return %arg0, %arg1 : i32, i32
  }
}

</mosaic_0001>

<llo_original>
// kernel: pallas_flatten.1
$region0: #{pallas_flatten.1}
  #allocation0 [shape = 'u32[]', space=smem, size = 0x4, offset = 0x4, fixed_abs, tag = 'smem constant byte address 0x4 - core index']
  #allocation1 [shape = 'u32[144,128]{1,0:T(1,128)}', space=vmem, size = 0x12000, scoped, tag = 'internal scratch']
  %s0 = inlined_call_operand.vmem [shape: f32[2,1024], index: 0, kind: input, shape index: {}]
  %s1 = inlined_call_operand.hbm [shape: f32[2,1024], index: 1, kind: output, shape index: {}]
  %s2 = sld [smem:[#allocation0]]
  $region14: #{pallas_flatten.1} parent=0
    _
  %s4 = ssub.s32 1, %s2
  %s5 = scalar_select 0, %s4, %s2
  $region1: #{pallas_flatten.1} parent=0
    #allocation2 [shape = 'u8[8192]{0}', space=vmem, size = 0x2000, scoped, tag = 'output window, operand 0, single buffered']
    #allocation3 [shape = 's32[1]{0}', space=sflag, size = 0x4, scoped, tag = 'scoped memory for pallas_flatten.1']
    %6 = vsyncpa [#allocation3], 0
    // Predicated region
    $region2: #{pallas_flatten.1} parent=1 // pred_check
      _
    $region3: #{pallas_flatten.1} parent=1 // pred_check_branch
      %8 = sbr.rel (0) target = $region5
    $region4: #{pallas_flatten.1} parent=1 // pred_region
      _
    $region5: #{pallas_flatten.1} parent=1 // pred_fallthru
      _
    %v9 = vld [vmem:[%s0] sm:$0xff]
    %v10 = vld [vmem:[%s0 + $0x8] sm:$0xff]
    %11 = vst [vmem:[#allocation2] sm:$0xff] %v9
    %12 = vst [vmem:[#allocation2 + $0x8] sm:$0xff] %v10
    // Predicated region
    $region6: #{pallas_flatten.1} parent=1 // pred_check
      _
    $region7: #{pallas_flatten.1} parent=1 // pred_check_branch
      %14 = sbr.rel (0) target = $region9
    $region8: #{pallas_flatten.1} parent=1 // pred_region
      %s16 = ssub.s32 256, 256
      %17 = vsyncadd [#allocation3], %s16
      %s19 = sshll.u32 [#allocation2], 4
      %s20 = int_to_ptr.vmem [resolvable:$true] %s19
      %22 = dma.vmem_to_hbm [thread:$0]  %s20, 256, %s1, [#allocation3]
    $region9: #{pallas_flatten.1} parent=1 // pred_fallthru
      _
    // Predicated region
    $region10: #{pallas_flatten.1} parent=1 // pred_check
      _
    $region11: #{pallas_flatten.1} parent=1 // pred_check_branch
      %24 = sbr.rel (0) target = $region13
    $region12: #{pallas_flatten.1} parent=1 // pred_region
      %25 = dma.done [#allocation3], 256
    $region13: #{pallas_flatten.1} parent=1 // pred_fallthru
      _
    %26 = vsyncpa [#allocation3], 1

</llo_original>
